<compile_context>
chip_gen: v5e
topology: v5e:2x2
jax: 0.10.0
libtpu: 0.0.40
codegen_flags: <defaults>
</compile_context>

<pallas_src>
import functools

import jax
import jax.numpy as jnp
from jax.experimental import pallas as pl
from jax.experimental.pallas import tpu as pltpu

LANES = 128


def _h_swish_kernel(x_ref, o_ref):
    x = x_ref[...]
    # relu6(x + 3) * (1/6) in the input dtype (constants are weakly typed).
    # multiply-by-reciprocal differs from `/ 6` by <= 1 ulp; fine for fp tols.
    o_ref[...] = x * (jnp.clip(x + 3.0, 0.0, 6.0) * (1.0 / 6.0))


def _target_block_bytes(device_kind: str) -> int:
    """Generation-aware tile size for an HBM-bandwidth-bound elementwise op."""
    k = device_kind.lower()
    if "v7" in k:
        # 3.2 TB/s HBM makes the ~0.35 us per-grid-step overhead a ~25% tax at
        # 2 MiB tiles; 6 MiB tiles cut it below 10%.  4 live buffers * 6 MiB
        # = 24 MiB, comfortably under v7x's 64 MiB physical VMEM.
        return 6 << 20
    if "v6" in k:
        return 4 << 20   # ~16 MiB live out of 128 MiB physical VMEM.
    return 2 << 20       # v5e (~0.82 TB/s): step overhead already <8% at 2 MiB.


def _h_swish_2d(x2d: jax.Array, *, inplace: bool) -> jax.Array:
    """Apply h_swish to a (rows, 128) lane-dense array via a 1-D grid."""
    rows, lanes = x2d.shape
    assert lanes == LANES
    dtype = x2d.dtype
    itemsize = jnp.dtype(dtype).itemsize
    # dtype-appropriate sublane multiple: f32 -> 8, bf16 -> 16.
    sublane = max(8, 32 // max(itemsize, 1))

    try:
        kind = jax.devices()[0].device_kind
    except Exception:  # defensive: fall back to conservative tiling
        kind = ""
    target_bytes = _target_block_bytes(kind)

    max_tile_rows = max(
        sublane, (target_bytes // (LANES * itemsize)) // sublane * sublane)

    if rows <= max_tile_rows:
        # Whole array fits in one tile.  v5e/v6e have a single TensorCore, so
        # the grid is a serial loop and splitting only adds per-step overhead;
        # only v7x (2 TCs) profits from >= 2 grid steps.
        if "v7" in kind.lower() and rows >= 2 * sublane:
            tile_rows = pl.cdiv(rows, 2 * sublane) * sublane
        else:
            tile_rows = rows          # full extent: always a legal block shape
    else:
        tile_rows = max_tile_rows     # multiple of `sublane`; the ragged last
                                      # block is handled by masked stores.

    grid = (pl.cdiv(rows, tile_rows),)
    tile_bytes = tile_rows * LANES * itemsize
    # 2 double-buffered inputs + 2 double-buffered outputs + headroom; capped
    # so it stays well under every generation's physical VMEM (v7x: 64 MiB).
    vmem_limit = min(48 << 20, max(32 << 20, 4 * tile_bytes + (8 << 20)))

    return pl.pallas_call(
        _h_swish_kernel,
        out_shape=jax.ShapeDtypeStruct((rows, LANES), dtype),
        grid_spec=pltpu.PrefetchScalarGridSpec(
            num_scalar_prefetch=0,
            grid=grid,
            in_specs=[pl.BlockSpec((tile_rows, LANES), lambda i: (i, 0))],
            out_specs=pl.BlockSpec((tile_rows, LANES), lambda i: (i, 0)),
        ),
        # TODO(synk): on v7x, verify via xprof that both TensorCores execute
        # grid steps under "parallel"; if not, switch to pltpu.CORE_PARALLEL.
        compiler_params=pltpu.CompilerParams(
            dimension_semantics=("parallel",),
            vmem_limit_bytes=vmem_limit,
        ),
        # When the caller is done with the input (inplace=True, mirroring the
        # PyTorch module's `inplace`), reuse its HBM buffer for the output.
        input_output_aliases=({0: 0} if inplace else {}),
    )(x2d)


@functools.partial(jax.jit, static_argnames=("inplace",))
def _h_swish_impl(x: jax.Array, *, inplace: bool) -> jax.Array:
    orig_shape = x.shape
    total = x.size
    if total == 0:
        return x

    x_flat = x.reshape(-1)
    rem = total % LANES
    body = total - rem

    pieces = []
    if body:
        # 128-lane-aligned prefix: free reshape, no padding, no post-slice.
        y2d = _h_swish_2d(
            x_flat[:body].reshape(body // LANES, LANES), inplace=inplace)
        pieces.append(y2d.reshape(-1))
    if rem:
        # < 128-element tail: trivial in plain JAX (replaces the old
        # full-tensor pad + slice path that tripled HBM traffic).
        tail = x_flat[body:]
        pieces.append(tail * (jnp.clip(tail + 3.0, 0.0, 6.0) * (1.0 / 6.0)))

    out_flat = pieces[0] if len(pieces) == 1 else jnp.concatenate(pieces)
    return out_flat.reshape(orig_shape)


def h_swish(x: jax.Array, inplace: bool = False) -> jax.Array:
    """y = x * relu6(x + 3) / 6  (MobileNetV3 h_swish)."""
    if not jnp.issubdtype(x.dtype, jnp.floating):
        raise TypeError(
            f"h_swish Pallas kernel supports floating dtypes only, got {x.dtype}")
    return _h_swish_impl(x, inplace=inplace)


if __name__ == "__main__":
    key = jax.random.PRNGKey(0)

    # NCHW input, small shape: batch=2, channels=4, spatial=16x16 (128-aligned).
    x = jax.random.normal(key, (2, 4, 16, 16), dtype=jnp.float32) * 4.0
    y = jax.block_until_ready(h_swish(x))
    ref = x * jnp.clip(x + 3.0, 0.0, 6.0) / 6.0
    assert y.shape == x.shape and y.dtype == x.dtype
    assert jnp.allclose(y, ref, atol=1e-6, rtol=1e-6), "mismatch vs reference"

    # Unaligned total exercises the aligned-prefix + JAX-tail path and the
    # inplace (input_output_aliases) variant.
    x2 = jax.random.normal(key, (3, 3, 7, 5), dtype=jnp.float32) * 4.0
    y2 = jax.block_until_ready(h_swish(x2, inplace=True))
    ref2 = x2 * jnp.clip(x2 + 3.0, 0.0, 6.0) / 6.0
    assert y2.shape == x2.shape and y2.dtype == x2.dtype
    assert jnp.allclose(y2, ref2, atol=1e-6, rtol=1e-6), "mismatch (unaligned)"

    print("KERNEL_OK")
</pallas_src>

<mosaic_0001>
module attributes {stable_mosaic.version = 11 : i64} {
  func.func @_h_swish_kernel(%arg0: i32, %arg1: memref<16x128xf32, #tpu.memory_space<vmem>>, %arg2: memref<16x128xf32, #tpu.memory_space<vmem>>) attributes {dimension_semantics = [#tpu.dimension_semantics<parallel>], iteration_bounds = array<i64: 1>, scalar_prefetch = 0 : i64, scratch_operands = 0 : i64, tpu.core_type = #tpu.core_type<tc>, window_params = [{transform_indices = @transform_0, window_bounds = array<i64: 16, 128>}, {transform_indices = @transform_1, window_bounds = array<i64: 16, 128>}]} {
    %c0 = arith.constant 0 : index
    %c0_0 = arith.constant 0 : index
    %0 = vector.load %arg1[%c0, %c0_0] : memref<16x128xf32, #tpu.memory_space<vmem>>, vector<16x128xf32>
    %cst = arith.constant 3.000000e+00 : f32
    %1 = vector.broadcast %cst : f32 to vector<16x128xf32>
    %2 = arith.addf %0, %1 : vector<16x128xf32>
    %cst_1 = arith.constant 0.000000e+00 : f32
    %cst_2 = arith.constant 6.000000e+00 : f32
    %3 = vector.broadcast %cst_1 : f32 to vector<16x128xf32>
    %4 = arith.maximumf %3, %2 : vector<16x128xf32>
    %5 = vector.broadcast %cst_2 : f32 to vector<16x128xf32>
    %6 = arith.minimumf %5, %4 : vector<16x128xf32>
    %cst_3 = arith.constant 0.166666672 : f32
    %7 = vector.broadcast %cst_3 : f32 to vector<16x128xf32>
    %8 = arith.mulf %6, %7 : vector<16x128xf32>
    %9 = arith.mulf %0, %8 : vector<16x128xf32>
    %c0_4 = arith.constant 0 : index
    %c0_5 = arith.constant 0 : index
    %10 = vector.load %arg2[%c0_4, %c0_5] : memref<16x128xf32, #tpu.memory_space<vmem>>, vector<16x128xf32>
    tpu.vector_store %arg2[%c0_4, %c0_5], %9 {strides = array<i32>} : memref<16x128xf32, #tpu.memory_space<vmem>>, vector<16x128xf32>,
    return
  }
  func.func @transform_0(%arg0: i32) -> (i32, i32) {
    %c0_i32 = arith.constant 0 : i32
    %c0_i32_0 = arith.constant 0 : i32
    return %arg0, %c0_i32 : i32, i32
  }
  func.func @transform_1(%arg0: i32) -> (i32, i32) {
    %c0_i32 = arith.constant 0 : i32
    %c0_i32_0 = arith.constant 0 : i32
    return %arg0, %c0_i32 : i32, i32
  }
}

</mosaic_0001>

<llo_original>
// kernel: _h_swish_impl.1
$region0: #{_h_swish_impl.1}
  #allocation0 [shape = 'u32[]', space=smem, size = 0x4, offset = 0x4, fixed_abs, tag = 'smem constant byte address 0x4 - core index']
  #allocation1 [shape = 'u32[72,128]{1,0:T(1,128)}', space=vmem, size = 0x9000, scoped, tag = 'internal scratch']
  %s0 = inlined_call_operand.vmem [shape: f32[16,128], index: 0, kind: input, shape index: {}]
  %s1 = inlined_call_operand.vmem [shape: f32[16,128], index: 1, kind: output, shape index: {}]
  %s2 = sld [smem:[#allocation0]]
  $region14: #{_h_swish_impl.1} parent=0
    _
  %s4 = ssub.s32 1, %s2
  %s5 = scalar_select 0, %s4, %s2
  // Predicated region
  $region2: #{_h_swish_impl.1} parent=0 // pred_check
    _
  $region3: #{_h_swish_impl.1} parent=0 // pred_check_branch
    %7 = sbr.rel (0) target = $region5
  $region4: #{_h_swish_impl.1} parent=0 // pred_region
    _
  $region5: #{_h_swish_impl.1} parent=0 // pred_fallthru
    _
  %v8 = vld [vmem:[%s0] sm:$0xff]
  %v9 = vld [vmem:[%s0 + $0x8] sm:$0xff]
  %v10 = vadd.f32 %v8, 3.0
  %v11 = vadd.f32 %v9, 3.0
  %v12 = vmax.f32 %v10, 0.0
  %v13 = vmax.f32 %v11, 0.0
  %v14 = vmin.f32 %v12, 6.0
  %v15 = vmin.f32 %v13, 6.0
  %v16 = vmul.f32 %v14, 0.16666667
  %v17 = vmul.f32 %v15, 0.16666667
  %v18 = vmul.f32 %v8, %v16
  %v19 = vmul.f32 %v9, %v17
  %20 = vst [vmem:[%s1] sm:$0xff] %v18
  %21 = vst [vmem:[%s1 + $0x8] sm:$0xff] %v19
  // Predicated region
  $region6: #{_h_swish_impl.1} parent=0 // pred_check
    _
  $region7: #{_h_swish_impl.1} parent=0 // pred_check_branch
    %23 = sbr.rel (0) target = $region9
  $region8: #{_h_swish_impl.1} parent=0 // pred_region
    _
  $region9: #{_h_swish_impl.1} parent=0 // pred_fallthru
    _
  // Predicated region
  $region10: #{_h_swish_impl.1} parent=0 // pred_check
    _
  $region11: #{_h_swish_impl.1} parent=0 // pred_check_branch
    %25 = sbr.rel (0) target = $region13
  $region12: #{_h_swish_impl.1} parent=0 // pred_region
    _
  $region13: #{_h_swish_impl.1} parent=0 // pred_fallthru
    _

</llo_original>
